<compile_context>
chip_gen: v6e
topology: v6e:2x2x1
jax: 0.10.0
libtpu: 0.0.40
codegen_flags: <defaults>
</compile_context>

<pallas_src>
import functools

import jax
import jax.numpy as jnp
from jax.experimental import pallas as pl
from jax.experimental.pallas import tpu as pltpu


def _cdiv(a, b):
    return -(-a // b)


def _fitnet_kernel(w_ref, s_ref, t_ref, o_ref, acc_ref, *, b_tile):
    j = pl.program_id(1)  # spatial-tile index (reduction axis, "arbitrary")

    # New batch block -> reset the (C_out, TS) accumulator tile.
    @pl.when(j == 0)
    def _():
        acc_ref[...] = jnp.zeros_like(acc_ref)

    w = w_ref[...]  # (C_out, C_in), native dtype into the MXU

    # Statically unrolled loop over the batch rows of this block: each iteration is
    # one MXU matmul (1x1 conv == channel matmul) + VPU-only square/accumulate.
    for b in range(b_tile):
        x = s_ref[b]  # (C_in, TS), native dtype
        pred = jnp.dot(w, x, preferred_element_type=jnp.float32)  # (C_out, TS) f32
        diff = pred - t_ref[b].astype(jnp.float32)
        acc_ref[...] += diff * diff  # elementwise (VPU) accumulate only

    # Last spatial tile of this batch block: one sublane reduce over C_out, then a
    # lane-dense (1, TS) store of the per-block partial sums.
    @pl.when(j == pl.num_programs(1) - 1)
    def _():
        o_ref[0] = jnp.sum(acc_ref[...], axis=0, keepdims=True)


def _choose_tiles(N, C_in, C_out, HW, itemsize, *,
                  vmem_budget_bytes=20 << 20,   # well under 32 MiB scoped limit
                  min_dma_bytes=1 << 20,        # target >= ~1 MiB per input DMA
                  max_ts=2048,
                  max_b_tile=8):
    """Pick (B_TILE, TS, n_sp): lane-dense spatial tiles sized from an explicit
    VMEM budget (double-buffered inputs + f32 accumulator + temporaries), then
    coarsen over batch while per-step DMAs are small and the budget still fits."""

    def bytes_per_lane_col(b):
        # 2x double-buffered student+teacher input columns
        # + f32 (C_out, TS) accumulator column + headroom for f32 pred/diff temps.
        return 2 * b * (C_in + C_out) * itemsize + 16 * C_out

    hw128 = _cdiv(HW, 128)  # spatial extent in 128-lane units
    cap128 = max(1, min(max_ts, vmem_budget_bytes // bytes_per_lane_col(1)) // 128)
    n_sp = _cdiv(hw128, cap128)          # number of spatial tiles
    ts = _cdiv(hw128, n_sp) * 128        # balanced tile size, multiple of 128

    b_tile = 1
    while (b_tile * 2 <= min(N, max_b_tile)
           and b_tile * (C_in + C_out) * ts * itemsize < min_dma_bytes
           and vmem_budget_bytes // bytes_per_lane_col(b_tile * 2) >= ts):
        b_tile *= 2

    return b_tile, ts, n_sp


def fitnet_loss(student, teacher, weight):
    """FitNet forward.

    student: (N, C_in, H, W) or (N, C_in)
    teacher: (N, C_out, H, W) or (N, C_out)
    weight:  (C_out, C_in)  -- Conv2d(C_in, C_out, 1, bias=False) weight, squeezed.
    Returns scalar f32 loss = mean((conv1x1(student) - teacher)^2).
    """
    if student.ndim == 2:
        student = student[:, :, None, None]
        teacher = teacher[:, :, None, None]

    N, C_in, H, W = student.shape
    _, C_out, _, _ = teacher.shape
    HW = H * W
    itemsize = jnp.dtype(student.dtype).itemsize

    b_tile, ts, n_sp = _choose_tiles(N, C_in, C_out, HW, itemsize)
    hw_p = n_sp * ts
    nb = _cdiv(N, b_tile)
    n_p = nb * b_tile

    s = student.reshape(N, C_in, HW)
    t = teacher.reshape(N, C_out, HW)
    # Zero padding (spatial up to n_sp*TS, batch up to NB*B_TILE) contributes
    # exactly 0 to the sum of squares; the mean divides by the true element count.
    if hw_p != HW or n_p != N:
        s = jnp.pad(s, ((0, n_p - N), (0, 0), (0, hw_p - HW)))
        t = jnp.pad(t, ((0, n_p - N), (0, 0), (0, hw_p - HW)))

    kernel = functools.partial(_fitnet_kernel, b_tile=b_tile)

    partials = pl.pallas_call(
        kernel,
        # Per-batch-block lane-dense partial sums; final tiny reduce done outside.
        out_shape=jax.ShapeDtypeStruct((nb, 1, ts), jnp.float32),
        grid=(nb, n_sp),
        in_specs=[
            # Weight: tiny, full-array block, resident across the whole grid.
            pl.BlockSpec((C_out, C_in), lambda n, j: (0, 0)),
            # Student: B_TILE batch rows, all input channels, one spatial tile.
            pl.BlockSpec((b_tile, C_in, ts), lambda n, j: (n, 0, j)),
            # Teacher: B_TILE batch rows, all output channels, matching tile.
            pl.BlockSpec((b_tile, C_out, ts), lambda n, j: (n, 0, j)),
        ],
        # One output block per batch block; resident across the spatial axis only.
        out_specs=pl.BlockSpec((1, 1, ts), lambda n, j: (n, 0, 0)),
        scratch_shapes=[pltpu.VMEM((C_out, ts), jnp.float32)],
        compiler_params=pltpu.CompilerParams(
            # Batch blocks are independent (per-block outputs) -> shardable across
            # v7x's two TensorCores; spatial is the reduction axis.
            dimension_semantics=("parallel", "arbitrary"),
            vmem_limit_bytes=32 * 1024 * 1024,
        ),
    )(weight, s, t)

    inv_count = 1.0 / float(N * C_out * HW)  # PyTorch .mean() over true elements
    return jnp.sum(partials) * inv_count


if __name__ == "__main__":
    key = jax.random.PRNGKey(0)
    k_s, k_t, k_w = jax.random.split(key, 3)

    # Small shapes consistent with the module: N=2, C_in=4, C_out=8, H=W=16 (NCHW).
    N, C_in, C_out, H, W = 2, 4, 8, 16, 16
    student = jax.random.normal(k_s, (N, C_in, H, W), dtype=jnp.float32)
    teacher = jax.random.normal(k_t, (N, C_out, H, W), dtype=jnp.float32)
    # Conv2d(C_in, C_out, 1, bias=False) weight, uniform(-0.005, 0.005), squeezed.
    weight = jax.random.uniform(
        k_w, (C_out, C_in), minval=-0.005, maxval=0.005, dtype=jnp.float32
    )

    loss = fitnet_loss(student, teacher, weight)
    jax.block_until_ready(loss)

    # Pure-JAX reference.
    pred_ref = jnp.einsum("oc,nchw->nohw", weight, student)
    ref = jnp.mean((pred_ref - teacher) ** 2)

    assert loss.shape == (), loss.shape
    assert loss.dtype == jnp.float32, loss.dtype
    assert jnp.allclose(loss, ref, rtol=1e-4, atol=1e-6), (float(loss), float(ref))

    print("KERNEL_OK")
</pallas_src>

<mosaic_0001>
module attributes {stable_mosaic.version = 11 : i64} {
  func.func @_fitnet_kernel(%arg0: i32, %arg1: i32, %arg2: memref<8x4xf32, #tpu.memory_space<vmem>>, %arg3: memref<2x4x256xf32, #tpu.memory_space<vmem>>, %arg4: memref<2x8x256xf32, #tpu.memory_space<vmem>>, %arg5: memref<1x1x256xf32, #tpu.memory_space<vmem>>, %arg6: memref<8x256xf32, #tpu.memory_space<vmem>>) attributes {dimension_semantics = [#tpu.dimension_semantics<parallel>, #tpu.dimension_semantics<arbitrary>], iteration_bounds = array<i64: 1, 1>, scalar_prefetch = 0 : i64, scratch_operands = 1 : i64, tpu.core_type = #tpu.core_type<tc>, window_params = [{pipeline_mode = #tpu.pipeline_mode<synchronous>, transform_indices = @transform_0, window_bounds = array<i64: 8, 4>}, {transform_indices = @transform_1, window_bounds = array<i64: 2, 4, 256>}, {transform_indices = @transform_2, window_bounds = array<i64: 2, 8, 256>}, {transform_indices = @transform_3, window_bounds = array<i64: 1, 1, 256>}]} {
    %c0_i32 = arith.constant 0 : i32
    %0 = arith.cmpi eq, %arg1, %c0_i32 : i32
    %1 = arith.extui %0 : i1 to i32
    %c0_i32_0 = arith.constant 0 : i32
    %2 = arith.cmpi ne, %1, %c0_i32_0 : i32
    scf.if %2 {
      %cst_24 = arith.constant 0.000000e+00 : f32
      %27 = vector.broadcast %cst_24 : f32 to vector<8x256xf32>
      %c0_25 = arith.constant 0 : index
      %c0_26 = arith.constant 0 : index
      %28 = vector.load %arg6[%c0_25, %c0_26] : memref<8x256xf32, #tpu.memory_space<vmem>>, vector<8x256xf32>
      tpu.vector_store %arg6[%c0_25, %c0_26], %27 {strides = array<i32>} : memref<8x256xf32, #tpu.memory_space<vmem>>, vector<8x256xf32>,
    } else {
    }
    %c0 = arith.constant 0 : index
    %c0_1 = arith.constant 0 : index
    %3 = vector.load %arg2[%c0, %c0_1] : memref<8x4xf32, #tpu.memory_space<vmem>>, vector<8x4xf32>
    %c0_2 = arith.constant 0 : index
    %c0_3 = arith.constant 0 : index
    %c0_4 = arith.constant 0 : index
    %4 = vector.load %arg3[%c0_2, %c0_3, %c0_4] : memref<2x4x256xf32, #tpu.memory_space<vmem>>, vector<1x4x256xf32>
    %5 = vector.shape_cast %4 : vector<1x4x256xf32> to vector<4x256xf32>
    %cst = arith.constant dense<0.000000e+00> : vector<8x256xf32>
    %6 = tpu.matmul %3, %5, %cst {dimension_numbers = #tpu.dot_dimension_numbers<[1], [0], [0], [1], [0, 0, 1, 1], [], []>} : vector<8x4xf32>, vector<4x256xf32>, vector<8x256xf32> -> vector<8x256xf32>
    %c0_5 = arith.constant 0 : index
    %c0_6 = arith.constant 0 : index
    %c0_7 = arith.constant 0 : index
    %7 = vector.load %arg4[%c0_5, %c0_6, %c0_7] : memref<2x8x256xf32, #tpu.memory_space<vmem>>, vector<1x8x256xf32>
    %8 = vector.shape_cast %7 : vector<1x8x256xf32> to vector<8x256xf32>
    %9 = arith.subf %6, %8 : vector<8x256xf32>
    %c0_8 = arith.constant 0 : index
    %c0_9 = arith.constant 0 : index
    %10 = vector.load %arg6[%c0_8, %c0_9] : memref<8x256xf32, #tpu.memory_space<vmem>>, vector<8x256xf32>
    %11 = arith.mulf %9, %9 : vector<8x256xf32>
    %12 = arith.addf %10, %11 : vector<8x256xf32>
    %c0_10 = arith.constant 0 : index
    %c0_11 = arith.constant 0 : index
    %13 = vector.load %arg6[%c0_10, %c0_11] : memref<8x256xf32, #tpu.memory_space<vmem>>, vector<8x256xf32>
    tpu.vector_store %arg6[%c0_10, %c0_11], %12 {strides = array<i32>} : memref<8x256xf32, #tpu.memory_space<vmem>>, vector<8x256xf32>,
    %c1 = arith.constant 1 : index
    %c0_12 = arith.constant 0 : index
    %c0_13 = arith.constant 0 : index
    %14 = vector.load %arg3[%c1, %c0_12, %c0_13] : memref<2x4x256xf32, #tpu.memory_space<vmem>>, vector<1x4x256xf32>
    %15 = vector.shape_cast %14 : vector<1x4x256xf32> to vector<4x256xf32>
    %cst_14 = arith.constant dense<0.000000e+00> : vector<8x256xf32>
    %16 = tpu.matmul %3, %15, %cst_14 {dimension_numbers = #tpu.dot_dimension_numbers<[1], [0], [0], [1], [0, 0, 1, 1], [], []>} : vector<8x4xf32>, vector<4x256xf32>, vector<8x256xf32> -> vector<8x256xf32>
    %c1_15 = arith.constant 1 : index
    %c0_16 = arith.constant 0 : index
    %c0_17 = arith.constant 0 : index
    %17 = vector.load %arg4[%c1_15, %c0_16, %c0_17] : memref<2x8x256xf32, #tpu.memory_space<vmem>>, vector<1x8x256xf32>
    %18 = vector.shape_cast %17 : vector<1x8x256xf32> to vector<8x256xf32>
    %19 = arith.subf %16, %18 : vector<8x256xf32>
    %c0_18 = arith.constant 0 : index
    %c0_19 = arith.constant 0 : index
    %20 = vector.load %arg6[%c0_18, %c0_19] : memref<8x256xf32, #tpu.memory_space<vmem>>, vector<8x256xf32>
    %21 = arith.mulf %19, %19 : vector<8x256xf32>
    %22 = arith.addf %20, %21 : vector<8x256xf32>
    %c0_20 = arith.constant 0 : index
    %c0_21 = arith.constant 0 : index
    %23 = vector.load %arg6[%c0_20, %c0_21] : memref<8x256xf32, #tpu.memory_space<vmem>>, vector<8x256xf32>
    tpu.vector_store %arg6[%c0_20, %c0_21], %22 {strides = array<i32>} : memref<8x256xf32, #tpu.memory_space<vmem>>, vector<8x256xf32>,
    %c0_i32_22 = arith.constant 0 : i32
    %24 = arith.cmpi eq, %arg1, %c0_i32_22 : i32
    %25 = arith.extui %24 : i1 to i32
    %c0_i32_23 = arith.constant 0 : i32
    %26 = arith.cmpi ne, %25, %c0_i32_23 : i32
    scf.if %26 {
      %c0_24 = arith.constant 0 : index
      %c0_25 = arith.constant 0 : index
      %27 = vector.load %arg6[%c0_24, %c0_25] : memref<8x256xf32, #tpu.memory_space<vmem>>, vector<8x256xf32>
      %cst_26 = arith.constant dense<0.000000e+00> : vector<256xf32>
      %28 = vector.multi_reduction <add>, %27, %cst_26 [0] : vector<8x256xf32> to vector<256xf32>
      %29 = vector.shape_cast %28 : vector<256xf32> to vector<1x256xf32>
      %c0_27 = arith.constant 0 : index
      %c0_28 = arith.constant 0 : index
      %c0_29 = arith.constant 0 : index
      %30 = vector.load %arg5[%c0_27, %c0_28, %c0_29] : memref<1x1x256xf32, #tpu.memory_space<vmem>>, vector<1x1x256xf32>
      %31 = vector.shape_cast %30 : vector<1x1x256xf32> to vector<1x256xf32>
      %32 = vector.shape_cast %29 : vector<1x256xf32> to vector<1x1x256xf32>
      tpu.vector_store %arg5[%c0_27, %c0_28, %c0_29], %32 {strides = array<i32>} : memref<1x1x256xf32, #tpu.memory_space<vmem>>, vector<1x1x256xf32>,
    } else {
    }
    return
  }
  func.func @transform_0(%arg0: i32, %arg1: i32) -> (i32, i32) {
    %c0_i32 = arith.constant 0 : i32
    %c0_i32_0 = arith.constant 0 : i32
    %c0_i32_1 = arith.constant 0 : i32
    return %c0_i32, %c0_i32_0 : i32, i32
  }
  func.func @transform_1(%arg0: i32, %arg1: i32) -> (i32, i32, i32) {
    %c0_i32 = arith.constant 0 : i32
    %c0_i32_0 = arith.constant 0 : i32
    return %arg0, %c0_i32, %arg1 : i32, i32, i32
  }
  func.func @transform_2(%arg0: i32, %arg1: i32) -> (i32, i32, i32) {
    %c0_i32 = arith.constant 0 : i32
    %c0_i32_0 = arith.constant 0 : i32
    return %arg0, %c0_i32, %arg1 : i32, i32, i32
  }
  func.func @transform_3(%arg0: i32, %arg1: i32) -> (i32, i32, i32) {
    %c0_i32 = arith.constant 0 : i32
    %c0_i32_0 = arith.constant 0 : i32
    %c0_i32_1 = arith.constant 0 : i32
    return %arg0, %c0_i32, %c0_i32_0 : i32, i32, i32
  }
}

</mosaic_0001>

<llo_original>
// kernel: tpu_custom_call.1
$region0: #{tpu_custom_call.1}
  #allocation0 [shape = 'u32[]', space=smem, size = 0x4, offset = 0x4, fixed_abs, tag = 'smem constant byte address 0x4 - core index']
  #allocation1 [shape = 'u32[144,128]{1,0:T(1,128)}', space=vmem, size = 0x12000, scoped, tag = 'internal scratch']
  #allocation2 [shape = 'f32[8,256]{1,0:T(8,128)}', space=vmem, size = 0x2000, scoped, tag = 'scratch operand']
  %s0 = inlined_call_operand.vmem [shape: f32[8,4], index: 0, kind: input, shape index: {}]
  %s1 = inlined_call_operand.hbm [shape: f32[2,4,256], index: 1, kind: input, shape index: {}]
  %s2 = inlined_call_operand.hbm [shape: f32[2,8,256], index: 2, kind: input, shape index: {}]
  %s3 = inlined_call_operand.hbm [shape: f32[1,1,256], index: 3, kind: output, shape index: {}]
  %s4 = sld [smem:[#allocation0]]
  $region38: #{tpu_custom_call.1} parent=0
    _
  %s6 = ssub.s32 1, %s4
  %s7 = scalar_select 0, %s6, %s4
  $region1: #{tpu_custom_call.1} parent=0
    #allocation3 [shape = 'u8[8192]{0}', space=vmem, size = 0x2000, scoped, tag = 'input window, operand 1, single buffered']
    #allocation4 [shape = 's32[1]{0}', space=sflag, size = 0x4, scoped, tag = 'scoped memory for tpu_custom_call.1']
    #allocation5 [shape = 's32[1]{0}', space=sflag, size = 0x4, scoped, tag = 'scoped memory for tpu_custom_call.1']
    #allocation6 [shape = 'u8[16384]{0}', space=vmem, size = 0x4000, scoped, tag = 'input window, operand 2, single buffered']
    #allocation7 [shape = 's32[1]{0}', space=sflag, size = 0x4, scoped, tag = 'scoped memory for tpu_custom_call.1']
    #allocation8 [shape = 'u8[1024]{0}', space=vmem, size = 0x400, scoped, tag = 'output window, operand 0, single buffered']
    %8 = vsyncpa [#allocation4], 0
    %9 = vsyncpa [#allocation7], 0
    %10 = vsyncpa [#allocation5], 0
    // Predicated region
    $region2: #{tpu_custom_call.1} parent=1 // pred_check
      _
    $region3: #{tpu_custom_call.1} parent=1 // pred_check_branch
      %12 = sbr.rel (0) target = $region5
    $region4: #{tpu_custom_call.1} parent=1 // pred_region
      _
    $region5: #{tpu_custom_call.1} parent=1 // pred_fallthru
      _
    // Predicated region
    $region6: #{tpu_custom_call.1} parent=1 // pred_check
      _
    $region7: #{tpu_custom_call.1} parent=1 // pred_check_branch
      %14 = sbr.rel (0) target = $region9
    $region8: #{tpu_custom_call.1} parent=1 // pred_region
      %s16 = ssub.s32 256, 256
      %17 = vsyncadd [#allocation4], %s16
      %s18 = sshll.u32 [#allocation3], 4
      %s19 = int_to_ptr.vmem [resolvable:$true] %s18
      %24 = dma.hbm_to_vmem [thread:$0]  %s1, 256, %s19, [#allocation4], 128, 128, 8
    $region9: #{tpu_custom_call.1} parent=1 // pred_fallthru
      _
    // Predicated region
    $region10: #{tpu_custom_call.1} parent=1 // pred_check
      _
    $region11: #{tpu_custom_call.1} parent=1 // pred_check_branch
      %26 = sbr.rel (0) target = $region13
    $region12: #{tpu_custom_call.1} parent=1 // pred_region
      %s28 = ssub.s32 512, 512
      %29 = vsyncadd [#allocation7], %s28
      %s30 = sshll.u32 [#allocation6], 4
      %s31 = int_to_ptr.vmem [resolvable:$true] %s30
      %36 = dma.hbm_to_vmem [thread:$0]  %s2, 512, %s31, [#allocation7], 256, 256, 16
    $region13: #{tpu_custom_call.1} parent=1 // pred_fallthru
      _
    // Predicated region
    $region14: #{tpu_custom_call.1} parent=1 // pred_check
      _
    $region15: #{tpu_custom_call.1} parent=1 // pred_check_branch
      %38 = sbr.rel (0) target = $region17
    $region16: #{tpu_custom_call.1} parent=1 // pred_region
      %39 = dma.done [#allocation4], 256
    $region17: #{tpu_custom_call.1} parent=1 // pred_fallthru
      _
    // Predicated region
    $region18: #{tpu_custom_call.1} parent=1 // pred_check
      _
    $region19: #{tpu_custom_call.1} parent=1 // pred_check_branch
      %41 = sbr.rel (0) target = $region21
    $region20: #{tpu_custom_call.1} parent=1 // pred_region
      %42 = dma.done [#allocation7], 512
    $region21: #{tpu_custom_call.1} parent=1 // pred_fallthru
      _
    %p43 = scmp.eq.s32.totalorder 0, 0
    // Predicated region
    $region22: #{tpu_custom_call.1} parent=1 // pred_check
      %p44 = pneg %p43
    $region23: #{tpu_custom_call.1} parent=1 // pred_check_branch
      %46 = sbr.rel (%p44) target = $region25
    $region24: #{tpu_custom_call.1} parent=1 // pred_region
      %47 = vst [vmem:[#allocation2] sm:$0xff] 0.0
      %48 = vst [vmem:[#allocation2 + $0x8] sm:$0xff] 0.0
    $region25: #{tpu_custom_call.1} parent=1 // pred_fallthru
      _
    %v49 = vld [vmem:[%s0] sm:$0xff]
    %v50 = vld [vmem:[#allocation3] sm:$0xff]
    %v52 = vcombine.high %v50, %v50
    %vm53 = vcmask 31744
    %v55 = vsel %vm53, %v49, 0
    %vm57 = vcmask 1043456
    %v58 = vsel %vm57, %v50, 0
    %v60 = vsel %vm57, %v52, 0
    %62 = vmatprep.subr.mxu0 0.0
    %63 = vmatpush1.msra.mxu0 0.0
    %64 = vmatprep.subr.mxu0 0.0
    %65 = vmatpush1.msra.mxu0 0.0
    %66 = vmatprep.subr.mxu0 0.0
    %67 = vmatpush1.msra.mxu0 0.0
    %68 = vmatprep.subr.mxu0 0.0
    %69 = vmatpush1.msra.mxu0 0.0
    %70 = vmatprep.subr.mxu0 0.0
    %71 = vmatpush1.msra.mxu0 0.0
    %72 = vmatprep.subr.mxu0 0.0
    %73 = vmatpush1.msra.mxu0 0.0
    %74 = vmatprep.subr.mxu0 0.0
    %75 = vmatpush1.msra.mxu0 0.0
    %76 = vmatprep.subr.mxu0 0.0
    %77 = vmatpush1.msra.mxu0 0.0
    %78 = vmatprep.subr.mxu0 0.0
    %79 = vmatpush1.msra.mxu0 0.0
    %80 = vmatprep.subr.mxu0 0.0
    %81 = vmatpush1.msra.mxu0 0.0
    %82 = vmatprep.subr.mxu0 0.0
    %83 = vmatpush1.msra.mxu0 0.0
    %84 = vmatprep.subr.mxu0 0.0
    %85 = vmatpush1.msra.mxu0 0.0
    %86 = vmatprep.subr.mxu0 0.0
    %87 = vmatpush1.msra.mxu0 0.0
    %88 = vmatprep.subr.mxu0 0.0
    %89 = vmatpush1.msra.mxu0 0.0
    %90 = vmatprep.subr.mxu0 0.0
    %91 = vmatpush1.msra.mxu0 0.0
    %92 = vmatprep.subr.mxu0 %v60
    %93 = vmatpush1.msra.mxu0 %v58
    %94 = vmatprep.subr.mxu0 0.0
    %95 = vmatpush2.msra.mxu0 0.0
    %96 = vmatprep.subr.mxu0 0.0
    %97 = vmatpush2.msra.mxu0 0.0
    %98 = vmatprep.subr.mxu0 0.0
    %99 = vmatpush2.msra.mxu0 0.0
    %100 = vmatprep.subr.mxu0 0.0
    %101 = vmatpush2.msra.mxu0 0.0
    %102 = vmatprep.subr.mxu0 0.0
    %103 = vmatpush2.msra.mxu0 0.0
    %104 = vmatprep.subr.mxu0 0.0
    %105 = vmatpush2.msra.mxu0 0.0
    %106 = vmatprep.subr.mxu0 0.0
    %107 = vmatpush2.msra.mxu0 0.0
    %108 = vmatprep.subr.mxu0 0.0
    %109 = vmatpush2.msra.mxu0 0.0
    %110 = vmatprep.subr.mxu0 0.0
    %111 = vmatpush2.msra.mxu0 0.0
    %112 = vmatprep.subr.mxu0 0.0
    %113 = vmatpush2.msra.mxu0 0.0
    %114 = vmatprep.subr.mxu0 0.0
    %115 = vmatpush2.msra.mxu0 0.0
    %116 = vmatprep.subr.mxu0 0.0
    %117 = vmatpush2.msra.mxu0 0.0
    %118 = vmatprep.subr.mxu0 0.0
    %119 = vmatpush2.msra.mxu0 0.0
    %120 = vmatprep.subr.mxu0 0.0
    %121 = vmatpush2.msra.mxu0 0.0
    %122 = vmatprep.subr.mxu0 0.0
    %123 = vmatpush2.msra.mxu0 0.0
    %124 = vmatprep.subr.mxu0 0.0
    %125 = vmatpush2.msra.mxu0 0.0
    %126 = vmatprep.mubr.f32.mxu0 0.0
    %127 = vmatmul.mubr.f32.gmra.mxu0 %v55
    %v128 = vpop.f32.mrf.mxu0
    %v129 = vadd.f32 0.0, %v128
    %v130 = vpop.f32.mrf.mxu0
    %v131 = vadd.f32 0.0, %v130
    %132 = vdwg.mxu0
    %v133 = vld [vmem:[#allocation6] sm:$0xff]
    %v134 = vld [vmem:[#allocation6 + $0x8] sm:$0xff]
    %v135 = vsub.f32 %v129, %v133
    %v136 = vsub.f32 %v131, %v134
    %v137 = vld [vmem:[#allocation2] sm:$0xff]
    %v138 = vld [vmem:[#allocation2 + $0x8] sm:$0xff]
    %v139 = vmul.f32 %v135, %v135
    %v140 = vmul.f32 %v136, %v136
    %v141 = vadd.f32 %v137, %v139
    %v142 = vadd.f32 %v138, %v140
    %143 = vst [vmem:[#allocation2] sm:$0xff] %v141
    %144 = vst [vmem:[#allocation2 + $0x8] sm:$0xff] %v142
    %s145 = scalar_lea.vmem [#allocation3], 8
    %v146 = vld [vmem:[%s145] sm:$0xff]
    %v148 = vcombine.high %v146, %v146
    %v149 = vsel %vm57, %v146, 0
    %v151 = vsel %vm57, %v148, 0
    %153 = vmatprep.subr.mxu0 0.0
    %154 = vmatpush1.msra.mxu0 0.0
    %155 = vmatprep.subr.mxu0 0.0
    %156 = vmatpush1.msra.mxu0 0.0
    %157 = vmatprep.subr.mxu0 0.0
    %158 = vmatpush1.msra.mxu0 0.0
    %159 = vmatprep.subr.mxu0 0.0
    %160 = vmatpush1.msra.mxu0 0.0
    %161 = vmatprep.subr.mxu0 0.0
    %162 = vmatpush1.msra.mxu0 0.0
    %163 = vmatprep.subr.mxu0 0.0
    %164 = vmatpush1.msra.mxu0 0.0
    %165 = vmatprep.subr.mxu0 0.0
    %166 = vmatpush1.msra.mxu0 0.0
    %167 = vmatprep.subr.mxu0 0.0
    %168 = vmatpush1.msra.mxu0 0.0
    %169 = vmatprep.subr.mxu0 0.0
    %170 = vmatpush1.msra.mxu0 0.0
    %171 = vmatprep.subr.mxu0 0.0
    %172 = vmatpush1.msra.mxu0 0.0
    %173 = vmatprep.subr.mxu0 0.0
    %174 = vmatpush1.msra.mxu0 0.0
    %175 = vmatprep.subr.mxu0 0.0
    %176 = vmatpush1.msra.mxu0 0.0
    %177 = vmatprep.subr.mxu0 0.0
    %178 = vmatpush1.msra.mxu0 0.0
    %179 = vmatprep.subr.mxu0 0.0
    %180 = vmatpush1.msra.mxu0 0.0
    %181 = vmatprep.subr.mxu0 0.0
    %182 = vmatpush1.msra.mxu0 0.0
    %183 = vmatprep.subr.mxu0 %v151
    %184 = vmatpush1.msra.mxu0 %v149
    %185 = vmatprep.subr.mxu0 0.0
    %186 = vmatpush2.msra.mxu0 0.0
    %187 = vmatprep.subr.mxu0 0.0
    %188 = vmatpush2.msra.mxu0 0.0
    %189 = vmatprep.subr.mxu0 0.0
    %190 = vmatpush2.msra.mxu0 0.0
    %191 = vmatprep.subr.mxu0 0.0
    %192 = vmatpush2.msra.mxu0 0.0
    %193 = vmatprep.subr.mxu0 0.0
    %194 = vmatpush2.msra.mxu0 0.0
    %195 = vmatprep.subr.mxu0 0.0
    %196 = vmatpush2.msra.mxu0 0.0
    %197 = vmatprep.subr.mxu0 0.0
    %198 = vmatpush2.msra.mxu0 0.0
    %199 = vmatprep.subr.mxu0 0.0
    %200 = vmatpush2.msra.mxu0 0.0
    %201 = vmatprep.subr.mxu0 0.0
    %202 = vmatpush2.msra.mxu0 0.0
    %203 = vmatprep.subr.mxu0 0.0
    %204 = vmatpush2.msra.mxu0 0.0
    %205 = vmatprep.subr.mxu0 0.0
    %206 = vmatpush2.msra.mxu0 0.0
    %207 = vmatprep.subr.mxu0 0.0
    %208 = vmatpush2.msra.mxu0 0.0
    %209 = vmatprep.subr.mxu0 0.0
    %210 = vmatpush2.msra.mxu0 0.0
    %211 = vmatprep.subr.mxu0 0.0
    %212 = vmatpush2.msra.mxu0 0.0
    %213 = vmatprep.subr.mxu0 0.0
    %214 = vmatpush2.msra.mxu0 0.0
    %215 = vmatprep.subr.mxu0 0.0
    %216 = vmatpush2.msra.mxu0 0.0
    %217 = vmatprep.mubr.f32.mxu0 0.0
    %218 = vmatmul.mubr.f32.gmra.mxu0 %v55
    %v219 = vpop.f32.mrf.mxu0
    %v220 = vadd.f32 0.0, %v219
    %v221 = vpop.f32.mrf.mxu0
    %v222 = vadd.f32 0.0, %v221
    %223 = vdwg.mxu0
    %s224 = scalar_lea.vmem [#allocation6], 16
    %v225 = vld [vmem:[%s224] sm:$0xff]
    %v226 = vld [vmem:[%s224 + $0x8] sm:$0xff]
    %v227 = vsub.f32 %v220, %v225
    %v228 = vsub.f32 %v222, %v226
    %v229 = vld [vmem:[#allocation2] sm:$0xff]
    %v230 = vld [vmem:[#allocation2 + $0x8] sm:$0xff]
    %v231 = vmul.f32 %v227, %v227
    %v232 = vmul.f32 %v228, %v228
    %v233 = vadd.f32 %v229, %v231
    %v234 = vadd.f32 %v230, %v232
    %235 = vst [vmem:[#allocation2] sm:$0xff] %v233
    %236 = vst [vmem:[#allocation2 + $0x8] sm:$0xff] %v234
    // Predicated region
    $region26: #{tpu_custom_call.1} parent=1 // pred_check
      %p237 = pneg %p43
    $region27: #{tpu_custom_call.1} parent=1 // pred_check_branch
      %239 = sbr.rel (%p237) target = $region29
    $region28: #{tpu_custom_call.1} parent=1 // pred_region
      %v240 = vld [vmem:[#allocation2] sm:$0xff]
      %v241 = vld [vmem:[#allocation2 + $0x8] sm:$0xff]
      %v242 = vrot.slane %v240, 4
      %v243 = vadd.f32 %v240, %v242
      %v244 = vrot.slane %v243, 2
      %v245 = vadd.f32 %v243, %v244
      %v246 = vrot.slane %v245, 1
      %v247 = vadd.f32 %v245, %v246
      %v248 = vrot.slane %v241, 4
      %v249 = vadd.f32 %v241, %v248
      %v250 = vrot.slane %v249, 2
      %v251 = vadd.f32 %v249, %v250
      %v252 = vrot.slane %v251, 1
      %v253 = vadd.f32 %v251, %v252
      %v256 = vcombine.low %v247, %v253
      %v258 = vunpack.c.l.s4 1966171168
      %v259 = vunpack.c.0.s8 %v258
      %v260 = vlaneseq
      %v261 = vshrl.u32 %v260, 7
      %v262 = vsub.s32 %v259, %v261
      %v263 = vrot.slane %v256, %v262
      %v265 = vunpack.c.l.s4 1966171168
      %v266 = vunpack.c.0.s8 %v265
      %v267 = vlaneseq
      %v268 = vshrl.u32 %v267, 7
      %v269 = vsub.s32 %v266, %v268
      %v270 = vrot.slane %v263, %v269
      %v272 = vlaneseq
      %vm273 = vcmp.ge.s32.totalorder %v272, 0
      %vm274 = vcmp.lt.s32.totalorder %v272, 256
      %vm275 = vmand %vm273, %vm274
      %276 = vst.msk [vmem:[#allocation8] sm:$0x3] %vm275, %v270
    $region29: #{tpu_custom_call.1} parent=1 // pred_fallthru
      _
    // Predicated region
    $region30: #{tpu_custom_call.1} parent=1 // pred_check
      _
    $region31: #{tpu_custom_call.1} parent=1 // pred_check_branch
      %278 = sbr.rel (0) target = $region33
    $region32: #{tpu_custom_call.1} parent=1 // pred_region
      %s280 = ssub.s32 32, 32
      %281 = vsyncadd [#allocation5], %s280
      %s283 = sshll.u32 [#allocation8], 4
      %s284 = int_to_ptr.vmem [resolvable:$true] %s283
      %286 = dma.vmem_to_hbm [thread:$0]  %s284, 32, %s3, [#allocation5]
    $region33: #{tpu_custom_call.1} parent=1 // pred_fallthru
      _
    // Predicated region
    $region34: #{tpu_custom_call.1} parent=1 // pred_check
      _
    $region35: #{tpu_custom_call.1} parent=1 // pred_check_branch
      %288 = sbr.rel (0) target = $region37
    $region36: #{tpu_custom_call.1} parent=1 // pred_region
      %289 = dma.done [#allocation5], 32
    $region37: #{tpu_custom_call.1} parent=1 // pred_fallthru
      _
    %290 = vsyncpa [#allocation4], 1
    %291 = vsyncpa [#allocation7], 1
    %292 = vsyncpa [#allocation5], 1

</llo_original>
